<compile_context>
chip_gen: v7x
topology: tpu7x:2x2x1
jax: 0.10.0
libtpu: 0.0.40
codegen_flags: <defaults>
</compile_context>

<pallas_src>
import functools

import jax
import jax.numpy as jnp
from jax.experimental import pallas as pl
from jax.experimental.pallas import tpu as pltpu


def _round_up(x, m):
    return ((x + m - 1) // m) * m


def planar_flow_kernel(wmat_ref, urep_ref, b_ref, x_ref, o_ref, *, num_flow):
    """One lane-dense batch tile through `num_flow` stacked planar flows.

    wmat_ref : (num_flow, 128, 128) f32 VMEM  block-diagonal reduce matrices
    urep_ref : (num_flow, 1, 128)   f32 VMEM  u replicated across each d-group
    b_ref    : (num_flow,)          f32 SMEM  scalar biases
    x_ref    : (TILE_R, 128)        VMEM      lane-dense view of the batch
    o_ref    : (TILE_R, 128)        VMEM      output (aliases x's HBM buffer)
    """
    z = x_ref[...].astype(jnp.float32)                 # (T, 128), f32 compute
    for i in range(num_flow):                          # tiny static trip count -> unrolled
        # arg = z @ w.T (+ b), already replicated across each element's d lanes (MXU).
        arg = jnp.dot(z, wmat_ref[i], preferred_element_type=jnp.float32)
        # tanh -> EUP slot; mul/add -> VPU.  (TODO(synk): on v7x, packing `arg`
        # densely before tanh would cut EUP pushes ~d x if num_flow grows.)
        z = z + urep_ref[i] * jnp.tanh(arg + b_ref[i])
    o_ref[...] = z.astype(o_ref.dtype)


def planar_flow_forward(x, u_stack, w_stack, b_stack, *, tile_rows=8192, min_steps=4):
    """x: (N, d); u_stack/w_stack: (F, d); b_stack: (F,).  Returns (N, d).

    F == 1 reproduces the PyTorch PlanarFlow.forward exactly; F > 1 applies
    the layers in sequence.
    """
    n, d = x.shape
    num_flow = u_stack.shape[0]
    if d > 128:
        # TODO(synk): latent dims > 128 need a different reduction layout.
        raise NotImplementedError("planar_flow_forward supports d <= 128")

    # d padded to a power of two so it divides the 128-lane vreg width.
    d_p = max(1, pl.next_power_of_2(d))
    g = 128 // d_p                       # batch elements per 128-lane row

    # Sublane granularity for the block's second-minor dim, by element size.
    itemsize = jnp.dtype(x.dtype).itemsize
    sub = max(8, 32 // itemsize)         # f32 -> 8, bf16 -> 16, int8 -> 32

    # ---- tiling: big blocks, >= min_steps grid steps, padding bounded by a
    # few rows (not a whole tile). ----
    tile_rows = max(int(tile_rows), sub)
    r = pl.cdiv(n, g)                                    # lane-dense rows needed
    k = max(min_steps, pl.cdiv(r, tile_rows))            # target number of steps
    tile_r = _round_up(pl.cdiv(r, k), sub)               # rows per block (<= ~tile_rows)
    grid_steps = pl.cdiv(r, tile_r)
    r_pad = grid_steps * tile_r
    n_pad = r_pad * g

    # ---- parameters -> lane-replicated / block-diagonal form (tiny). ----
    lane = jnp.arange(128)
    w_pad = jnp.zeros((num_flow, d_p), jnp.float32).at[:, :d].set(w_stack.astype(jnp.float32))
    u_pad = jnp.zeros((num_flow, d_p), jnp.float32).at[:, :d].set(u_stack.astype(jnp.float32))
    group_mask = ((lane[:, None] // d_p) == (lane[None, :] // d_p)).astype(jnp.float32)
    w_rep = w_pad[:, lane % d_p]                         # (F, 128)
    u_rep = u_pad[:, lane % d_p].reshape(num_flow, 1, 128)
    w_mat = w_rep[:, :, None] * group_mask[None, :, :]   # (F, 128, 128) block-diagonal
    b_vec = b_stack.astype(jnp.float32).reshape(num_flow)

    # ---- zero-copy lane-dense view of x (pad only when not already aligned;
    # fully aligned batches incur no extra HBM pass at all). ----
    if n_pad != n or d_p != d:
        x_in = jnp.pad(x, ((0, n_pad - n), (0, d_p - d)))
    else:
        x_in = x
    z2d = x_in.reshape(r_pad, 128)                       # contiguous -> bitcast-like reshape

    kernel = functools.partial(planar_flow_kernel, num_flow=num_flow)
    y2d = pl.pallas_call(
        kernel,
        out_shape=jax.ShapeDtypeStruct((r_pad, 128), x.dtype),   # HBM I/O in x.dtype
        grid=(grid_steps,),
        in_specs=[
            pl.BlockSpec((num_flow, 128, 128), lambda i: (0, 0, 0)),  # w_mat (resident)
            pl.BlockSpec((num_flow, 1, 128), lambda i: (0, 0, 0)),    # u_rep (resident)
            pl.BlockSpec(memory_space=pltpu.SMEM),                    # biases (scalars)
            pl.BlockSpec((tile_r, 128), lambda i: (i, 0)),            # z tile (lane-dense)
        ],
        out_specs=pl.BlockSpec((tile_r, 128), lambda i: (i, 0)),
        input_output_aliases={3: 0},     # mem-bound: output overwrites the input buffer
        compiler_params=pltpu.CompilerParams(
            dimension_semantics=("parallel",),        # split batch tiles across TCs (v7x)
            vmem_limit_bytes=48 * 1024 * 1024,        # explicit (v5e default 16 MiB);
        ),                                            # <= 48 MiB keeps v7x (64 MiB) headroom
    )(w_mat, u_rep, b_vec, z2d)

    y = y2d.reshape(n_pad, d_p)          # free reshape back to (N_pad, d_p)
    return y[:n, :d]                     # no-op when already aligned


def planar_flow_reference(x, u_stack, w_stack, b_stack):
    """Plain-JAX reference matching the PyTorch PlanarFlow forward exactly."""
    z = x
    for i in range(u_stack.shape[0]):
        arg = z @ w_stack[i][:, None] + b_stack[i]       # (N, 1)
        z = z + u_stack[i][None, :] * jnp.tanh(arg)      # (N, d)
    return z


if __name__ == "__main__":
    d = 8                # latent dim (PlanarFlow's `d`)
    num_flow = 4         # stacked flows; num_flow = 1 is exactly the PyTorch module
    batch = 300          # deliberately not tile-aligned: exercises padding + grid
    init_sigma = 0.01

    key = jax.random.PRNGKey(0)
    k_u, k_w, k_x = jax.random.split(key, 3)

    # Mirrors PlanarFlow.__init__: u, w ~ Normal(0, init_sigma), b = 0.
    u_stack = (init_sigma * jax.random.normal(k_u, (num_flow, d))).astype(jnp.float32)
    w_stack = (init_sigma * jax.random.normal(k_w, (num_flow, d))).astype(jnp.float32)
    b_stack = jnp.zeros((num_flow,), dtype=jnp.float32)
    x = jax.random.normal(k_x, (batch, d), dtype=jnp.float32)

    fwd = jax.jit(planar_flow_forward)

    # Stacked flows.
    y = jax.block_until_ready(fwd(x, u_stack, w_stack, b_stack))
    y_ref = planar_flow_reference(x, u_stack, w_stack, b_stack)
    assert y.shape == (batch, d) and y.dtype == x.dtype
    # MXU default precision rounds operands to bf16; the induced error on z is
    # ~|u| * 1e-4 (<< this tolerance).  Use precision='highest' for exact f32.
    assert jnp.allclose(y, y_ref, atol=5e-5, rtol=5e-5), "mismatch vs reference (stacked)"

    # Single flow == the original PyTorch module's forward.
    y1 = jax.block_until_ready(fwd(x, u_stack[:1], w_stack[:1], b_stack[:1]))
    y1_ref = planar_flow_reference(x, u_stack[:1], w_stack[:1], b_stack[:1])
    assert jnp.allclose(y1, y1_ref, atol=5e-5, rtol=5e-5), "mismatch vs reference (single)"

    print("KERNEL_OK")
</pallas_src>

<mosaic_0001>
module attributes {stable_mosaic.version = 11 : i64} {
  func.func @planar_flow_kernel(%arg0: i32, %arg1: memref<4x128x128xf32, #tpu.memory_space<vmem>>, %arg2: memref<4x1x128xf32, #tpu.memory_space<vmem>>, %arg3: memref<4xf32, #tpu.memory_space<smem>>, %arg4: memref<8x128xf32, #tpu.memory_space<vmem>>, %arg5: memref<8x128xf32, #tpu.memory_space<vmem>>) attributes {dimension_semantics = [#tpu.dimension_semantics<parallel>], iteration_bounds = array<i64: 3>, scalar_prefetch = 0 : i64, scratch_operands = 0 : i64, tpu.core_type = #tpu.core_type<tc>, window_params = [{pipeline_mode = #tpu.pipeline_mode<synchronous>, transform_indices = @transform_0, window_bounds = array<i64: 4, 128, 128>}, {pipeline_mode = #tpu.pipeline_mode<synchronous>, transform_indices = @transform_1, window_bounds = array<i64: 4, 1, 128>}, {transform_indices = @transform_2, window_bounds = array<i64: 4>}, {transform_indices = @transform_3, window_bounds = array<i64: 8, 128>}, {transform_indices = @transform_4, window_bounds = array<i64: 8, 128>}]} {
    %c0 = arith.constant 0 : index
    %c0_0 = arith.constant 0 : index
    %0 = vector.load %arg4[%c0, %c0_0] : memref<8x128xf32, #tpu.memory_space<vmem>>, vector<8x128xf32>
    %c0_1 = arith.constant 0 : index
    %c0_2 = arith.constant 0 : index
    %c0_3 = arith.constant 0 : index
    %1 = vector.load %arg1[%c0_1, %c0_2, %c0_3] : memref<4x128x128xf32, #tpu.memory_space<vmem>>, vector<1x128x128xf32>
    %2 = vector.shape_cast %1 : vector<1x128x128xf32> to vector<128x128xf32>
    %cst = arith.constant dense<0.000000e+00> : vector<8x128xf32>
    %3 = tpu.matmul %0, %2, %cst {dimension_numbers = #tpu.dot_dimension_numbers<[1], [0], [0], [1], [0, 0, 1, 1], [], []>} : vector<8x128xf32>, vector<128x128xf32>, vector<8x128xf32> -> vector<8x128xf32>
    %c0_4 = arith.constant 0 : index
    %c0_5 = arith.constant 0 : index
    %c0_6 = arith.constant 0 : index
    %4 = vector.load %arg2[%c0_4, %c0_5, %c0_6] : memref<4x1x128xf32, #tpu.memory_space<vmem>>, vector<1x1x128xf32>
    %5 = vector.shape_cast %4 : vector<1x1x128xf32> to vector<1x128xf32>
    %c0_7 = arith.constant 0 : index
    %6 = memref.load %arg3[%c0_7] : memref<4xf32, #tpu.memory_space<smem>>
    %7 = vector.broadcast %6 : f32 to vector<8x128xf32>
    %8 = arith.addf %3, %7 : vector<8x128xf32>
    %9 = math.tanh %8 : vector<8x128xf32>
    %10 = vector.broadcast %5 : vector<1x128xf32> to vector<8x128xf32>
    %11 = arith.mulf %10, %9 : vector<8x128xf32>
    %12 = arith.addf %0, %11 : vector<8x128xf32>
    %c1 = arith.constant 1 : index
    %c0_8 = arith.constant 0 : index
    %c0_9 = arith.constant 0 : index
    %13 = vector.load %arg1[%c1, %c0_8, %c0_9] : memref<4x128x128xf32, #tpu.memory_space<vmem>>, vector<1x128x128xf32>
    %14 = vector.shape_cast %13 : vector<1x128x128xf32> to vector<128x128xf32>
    %cst_10 = arith.constant dense<0.000000e+00> : vector<8x128xf32>
    %15 = tpu.matmul %12, %14, %cst_10 {dimension_numbers = #tpu.dot_dimension_numbers<[1], [0], [0], [1], [0, 0, 1, 1], [], []>} : vector<8x128xf32>, vector<128x128xf32>, vector<8x128xf32> -> vector<8x128xf32>
    %c1_11 = arith.constant 1 : index
    %c0_12 = arith.constant 0 : index
    %c0_13 = arith.constant 0 : index
    %16 = vector.load %arg2[%c1_11, %c0_12, %c0_13] : memref<4x1x128xf32, #tpu.memory_space<vmem>>, vector<1x1x128xf32>
    %17 = vector.shape_cast %16 : vector<1x1x128xf32> to vector<1x128xf32>
    %c1_14 = arith.constant 1 : index
    %18 = memref.load %arg3[%c1_14] : memref<4xf32, #tpu.memory_space<smem>>
    %19 = vector.broadcast %18 : f32 to vector<8x128xf32>
    %20 = arith.addf %15, %19 : vector<8x128xf32>
    %21 = math.tanh %20 : vector<8x128xf32>
    %22 = vector.broadcast %17 : vector<1x128xf32> to vector<8x128xf32>
    %23 = arith.mulf %22, %21 : vector<8x128xf32>
    %24 = arith.addf %12, %23 : vector<8x128xf32>
    %c2 = arith.constant 2 : index
    %c0_15 = arith.constant 0 : index
    %c0_16 = arith.constant 0 : index
    %25 = vector.load %arg1[%c2, %c0_15, %c0_16] : memref<4x128x128xf32, #tpu.memory_space<vmem>>, vector<1x128x128xf32>
    %26 = vector.shape_cast %25 : vector<1x128x128xf32> to vector<128x128xf32>
    %cst_17 = arith.constant dense<0.000000e+00> : vector<8x128xf32>
    %27 = tpu.matmul %24, %26, %cst_17 {dimension_numbers = #tpu.dot_dimension_numbers<[1], [0], [0], [1], [0, 0, 1, 1], [], []>} : vector<8x128xf32>, vector<128x128xf32>, vector<8x128xf32> -> vector<8x128xf32>
    %c2_18 = arith.constant 2 : index
    %c0_19 = arith.constant 0 : index
    %c0_20 = arith.constant 0 : index
    %28 = vector.load %arg2[%c2_18, %c0_19, %c0_20] : memref<4x1x128xf32, #tpu.memory_space<vmem>>, vector<1x1x128xf32>
    %29 = vector.shape_cast %28 : vector<1x1x128xf32> to vector<1x128xf32>
    %c2_21 = arith.constant 2 : index
    %30 = memref.load %arg3[%c2_21] : memref<4xf32, #tpu.memory_space<smem>>
    %31 = vector.broadcast %30 : f32 to vector<8x128xf32>
    %32 = arith.addf %27, %31 : vector<8x128xf32>
    %33 = math.tanh %32 : vector<8x128xf32>
    %34 = vector.broadcast %29 : vector<1x128xf32> to vector<8x128xf32>
    %35 = arith.mulf %34, %33 : vector<8x128xf32>
    %36 = arith.addf %24, %35 : vector<8x128xf32>
    %c3 = arith.constant 3 : index
    %c0_22 = arith.constant 0 : index
    %c0_23 = arith.constant 0 : index
    %37 = vector.load %arg1[%c3, %c0_22, %c0_23] : memref<4x128x128xf32, #tpu.memory_space<vmem>>, vector<1x128x128xf32>
    %38 = vector.shape_cast %37 : vector<1x128x128xf32> to vector<128x128xf32>
    %cst_24 = arith.constant dense<0.000000e+00> : vector<8x128xf32>
    %39 = tpu.matmul %36, %38, %cst_24 {dimension_numbers = #tpu.dot_dimension_numbers<[1], [0], [0], [1], [0, 0, 1, 1], [], []>} : vector<8x128xf32>, vector<128x128xf32>, vector<8x128xf32> -> vector<8x128xf32>
    %c3_25 = arith.constant 3 : index
    %c0_26 = arith.constant 0 : index
    %c0_27 = arith.constant 0 : index
    %40 = vector.load %arg2[%c3_25, %c0_26, %c0_27] : memref<4x1x128xf32, #tpu.memory_space<vmem>>, vector<1x1x128xf32>
    %41 = vector.shape_cast %40 : vector<1x1x128xf32> to vector<1x128xf32>
    %c3_28 = arith.constant 3 : index
    %42 = memref.load %arg3[%c3_28] : memref<4xf32, #tpu.memory_space<smem>>
    %43 = vector.broadcast %42 : f32 to vector<8x128xf32>
    %44 = arith.addf %39, %43 : vector<8x128xf32>
    %45 = math.tanh %44 : vector<8x128xf32>
    %46 = vector.broadcast %41 : vector<1x128xf32> to vector<8x128xf32>
    %47 = arith.mulf %46, %45 : vector<8x128xf32>
    %48 = arith.addf %36, %47 : vector<8x128xf32>
    %c0_29 = arith.constant 0 : index
    %c0_30 = arith.constant 0 : index
    %49 = vector.load %arg5[%c0_29, %c0_30] : memref<8x128xf32, #tpu.memory_space<vmem>>, vector<8x128xf32>
    tpu.vector_store %arg5[%c0_29, %c0_30], %48 {strides = array<i32>} : memref<8x128xf32, #tpu.memory_space<vmem>>, vector<8x128xf32>,
    return
  }
  func.func @transform_0(%arg0: i32) -> (i32, i32, i32) {
    %c0_i32 = arith.constant 0 : i32
    %c0_i32_0 = arith.constant 0 : i32
    %c0_i32_1 = arith.constant 0 : i32
    %c0_i32_2 = arith.constant 0 : i32
    return %c0_i32, %c0_i32_0, %c0_i32_1 : i32, i32, i32
  }
  func.func @transform_1(%arg0: i32) -> (i32, i32, i32) {
    %c0_i32 = arith.constant 0 : i32
    %c0_i32_0 = arith.constant 0 : i32
    %c0_i32_1 = arith.constant 0 : i32
    %c0_i32_2 = arith.constant 0 : i32
    return %c0_i32, %c0_i32_0, %c0_i32_1 : i32, i32, i32
  }
  func.func @transform_2(%arg0: i32) -> i32 {
    %c0_i32 = arith.constant 0 : i32
    %c0_i32_0 = arith.constant 0 : i32
    return %c0_i32 : i32
  }
  func.func @transform_3(%arg0: i32) -> (i32, i32) {
    %c0_i32 = arith.constant 0 : i32
    %c0_i32_0 = arith.constant 0 : i32
    return %arg0, %c0_i32 : i32, i32
  }
  func.func @transform_4(%arg0: i32) -> (i32, i32) {
    %c0_i32 = arith.constant 0 : i32
    %c0_i32_0 = arith.constant 0 : i32
    return %arg0, %c0_i32 : i32, i32
  }
}

</mosaic_0001>

<llo_original>
// kernel: planar_flow_forward.1
$region0: #{planar_flow_forward.1}
  #allocation0 [shape = 'u32[]', space=smem, size = 0x4, offset = 0x4, fixed_abs, tag = 'smem constant byte address 0x4 - core index']
  #allocation1 [shape = 'u32[144,128]{1,0:T(1,128)}', space=vmem, size = 0x12000, scoped, tag = 'internal scratch']
  %s0 = inlined_call_operand.vmem [shape: f32[4,128,128], index: 0, kind: input, shape index: {}]
  %s1 = inlined_call_operand.vmem [shape: f32[4,1,128], index: 1, kind: input, shape index: {}]
  %s2 = inlined_call_operand.vmem [shape: f32[4], index: 2, kind: input, shape index: {}]
  %s3 = inlined_call_operand.vmem [shape: f32[24,128], index: 3, kind: input, shape index: {}, may-alias: {3,4}]
  %s4 = inlined_call_operand.vmem [shape: f32[24,128], index: 4, kind: output, shape index: {}, may-alias: {3,4}]
  %s5 = sld [smem:[#allocation0]]
  $region53: #{planar_flow_forward.1} parent=0
    _
  %s7 = ssub.s32 1, %s5
  %s8 = scalar_select 0, %s7, %s5
  $region1: #{planar_flow_forward.1} parent=0
    #allocation2 [shape = 'u8[512]{0}', space=smem, size = 0x200, scoped, tag = 'input window, operand 2, single buffered']
    #allocation3 [shape = 's32[2]{0}', space=sflag, size = 0x8, scoped, tag = 'scoped memory for planar_flow_forward.1']
    %9 = vsyncpa [#allocation3], 0
    loop: start=0, step=1, limit=5
    $region2: #{planar_flow_forward.1} parent=1 // loop_pre_header
      _
    $region3: #{planar_flow_forward.1} parent=1 // loop_header
      %s11 = sphi 0, %s15
      %p12 = scmp.ge.s32.totalorder %s11, 5
      %s19 = sphi 0, %s19
      %s21 = sphi 0, %s19
      %s22 = sphi 0, %s21
      %s36 = sphi 0, %s22
      %s40 = sphi 0, %s40
      %s42 = sphi 0, %s40
      %s43 = sphi 0, %s42
      %s57 = sphi 0, %s43
      %s61 = sphi 0, %s61
      %s63 = sphi 0, %s61
      %s64 = sphi 0, %s63
      %s78 = sphi 0, %s64
      %s84 = sphi 0, %s86
      %s87 = sphi 0, %s84
      %s88 = sphi 0, %s87
      %s104 = sphi 0, %s88
      %s110 = sphi 0, %s112
      %s113 = sphi 0, %s110
      %s114 = sphi 0, %s113
      %s130 = sphi 0, %s114
    $region4: #{planar_flow_forward.1} parent=1 // loop_header_branch
      %14 = sbr.rel (%p12) target = $region8
    $region5: #{planar_flow_forward.1} parent=1 // loop_body
      %s16 = ssub.s32 %s11, 1
      %s17 = ssub.s32 %s11, 2
      %s18 = sadd.s32 %s11, 1
      %s20 = sadd.s32 %s19, 1
      %p23 = scmp.eq.s32.totalorder %s11, 2
      %p24 = scmp.ne.s32.totalorder %s19, %s21
      %p25 = scmp.eq.s32.totalorder %s11, 0
      %p26 = por %p24, %p25
      %p27 = scmp.ne.s32.totalorder %s19, %s21
      %p28 = scmp.eq.s32.totalorder %s16, 2
      %p29 = por %p27, %p28
      %p30 = scmp.ne.s32.totalorder %s21, %s22
      %p31 = scmp.eq.s32.totalorder %s16, 0
      %p32 = por %p30, %p31
      %p33 = scmp.ne.s32.totalorder %s21, %s22
      %p34 = scmp.eq.s32.totalorder %s17, 2
      %p35 = por %p33, %p34
      %p37 = scmp.ne.s32.totalorder %s22, %s36
      %p38 = scmp.eq.s32.totalorder %s17, 0
      %p39 = por %p37, %p38
      %s41 = sadd.s32 %s40, 1
      %p44 = scmp.eq.s32.totalorder %s11, 2
      %p45 = scmp.ne.s32.totalorder %s40, %s42
      %p46 = scmp.eq.s32.totalorder %s11, 0
      %p47 = por %p45, %p46
      %p48 = scmp.ne.s32.totalorder %s40, %s42
      %p49 = scmp.eq.s32.totalorder %s16, 2
      %p50 = por %p48, %p49
      %p51 = scmp.ne.s32.totalorder %s42, %s43
      %p52 = scmp.eq.s32.totalorder %s16, 0
      %p53 = por %p51, %p52
      %p54 = scmp.ne.s32.totalorder %s42, %s43
      %p55 = scmp.eq.s32.totalorder %s17, 2
      %p56 = por %p54, %p55
      %p58 = scmp.ne.s32.totalorder %s43, %s57
      %p59 = scmp.eq.s32.totalorder %s17, 0
      %p60 = por %p58, %p59
      %s62 = sadd.s32 %s61, 1
      %p65 = scmp.eq.s32.totalorder %s11, 2
      %p66 = scmp.ne.s32.totalorder %s61, %s63
      %p67 = scmp.eq.s32.totalorder %s11, 0
      %p68 = por %p66, %p67
      %p69 = scmp.ne.s32.totalorder %s61, %s63
      %p70 = scmp.eq.s32.totalorder %s16, 2
      %p71 = por %p69, %p70
      %p72 = scmp.ne.s32.totalorder %s63, %s64
      %p73 = scmp.eq.s32.totalorder %s16, 0
      %p74 = por %p72, %p73
      %p75 = scmp.ne.s32.totalorder %s63, %s64
      %p76 = scmp.eq.s32.totalorder %s17, 2
      %p77 = por %p75, %p76
      %p79 = scmp.ne.s32.totalorder %s64, %s78
      %p80 = scmp.eq.s32.totalorder %s17, 0
      %p81 = por %p79, %p80
      %s82 = ssub.s32 %s11, %s18
      %p83 = scmp.eq.s32.totalorder %s82, 0
      %s85 = sadd.s32 %s84, 1
      %s86 = scalar_select %p83, %s84, %s85
      %p89 = pneg %p83
      %p90 = scmp.eq.s32.totalorder %s11, 2
      %p91 = por %p89, %p90
      %p92 = scmp.ne.s32.totalorder %s84, %s87
      %p93 = scmp.eq.s32.totalorder %s11, 0
      %p94 = por %p92, %p93
      %p95 = scmp.ne.s32.totalorder %s84, %s87
      %p96 = scmp.eq.s32.totalorder %s16, 2
      %p97 = por %p95, %p96
      %p98 = scmp.ne.s32.totalorder %s87, %s88
      %p99 = scmp.eq.s32.totalorder %s16, 0
      %p100 = por %p98, %p99
      %p101 = scmp.ne.s32.totalorder %s87, %s88
      %p102 = scmp.eq.s32.totalorder %s17, 2
      %p103 = por %p101, %p102
      %p105 = scmp.ne.s32.totalorder %s88, %s104
      %p106 = scmp.eq.s32.totalorder %s17, 0
      %p107 = por %p105, %p106
      %s108 = ssub.s32 %s11, %s18
      %p109 = scmp.eq.s32.totalorder %s108, 0
      %s111 = sadd.s32 %s110, 1
      %s112 = scalar_select %p109, %s110, %s111
      %p115 = pneg %p109
      %p116 = scmp.eq.s32.totalorder %s11, 2
      %p117 = por %p115, %p116
      %p118 = scmp.ne.s32.totalorder %s110, %s113
      %p119 = scmp.eq.s32.totalorder %s11, 0
      %p120 = por %p118, %p119
      %p121 = scmp.ne.s32.totalorder %s110, %s113
      %p122 = scmp.eq.s32.totalorder %s16, 2
      %p123 = por %p121, %p122
      %p124 = scmp.ne.s32.totalorder %s113, %s114
      %p125 = scmp.eq.s32.totalorder %s16, 0
      %p126 = por %p124, %p125
      %p127 = scmp.ne.s32.totalorder %s113, %s114
      %p128 = scmp.eq.s32.totalorder %s17, 2
      %p129 = por %p127, %p128
      %p131 = scmp.ne.s32.totalorder %s114, %s130
      %p132 = scmp.eq.s32.totalorder %s17, 0
      %p133 = por %p131, %p132
      %p134 = scmp.le.s32.totalorder 1, %s11
      %p135 = scmp.lt.s32.totalorder %s11, 4
      %p136 = pnand %p134, %p135
      %p137 = pneg %p136
      // Predicated region
      $region9: #{planar_flow_forward.1} parent=5 // pred_check
        _
      $region10: #{planar_flow_forward.1} parent=5 // pred_check_branch
        %139 = sbr.rel (%p136) target = $region12
      $region11: #{planar_flow_forward.1} parent=5 // pred_region
        %s140 = ssub.s32 %s11, 1
        // Predicated region
        $region13: #{planar_flow_forward.1} parent=11 // pred_check
          %p141 = pneg %p32
        $region14: #{planar_flow_forward.1} parent=11 // pred_check_branch
          %143 = sbr.rel (%p141) target = $region16
        $region15: #{planar_flow_forward.1} parent=11 // pred_region
          _
        $region16: #{planar_flow_forward.1} parent=11 // pred_fallthru
          _
        // Predicated region
        $region17: #{planar_flow_forward.1} parent=11 // pred_check
          %p144 = pneg %p53
        $region18: #{planar_flow_forward.1} parent=11 // pred_check_branch
          %146 = sbr.rel (%p144) target = $region20
        $region19: #{planar_flow_forward.1} parent=11 // pred_region
          _
        $region20: #{planar_flow_forward.1} parent=11 // pred_fallthru
          _
        // Predicated region
        $region21: #{planar_flow_forward.1} parent=11 // pred_check
          %p147 = pneg %p74
        $region22: #{planar_flow_forward.1} parent=11 // pred_check_branch
          %149 = sbr.rel (%p147) target = $region24
        $region23: #{planar_flow_forward.1} parent=11 // pred_region
          %s151 = ssub.s32 16, 16
          %152 = vsyncadd [#allocation3], %s151
          %s154 = sshll.u32 %s2, 4
          %s155 = int_to_ptr.vmem [resolvable:$true] %s154
          %157 = dma.vmem_to_smem %s155, 16, [#allocation2], [#allocation3]
        $region24: #{planar_flow_forward.1} parent=11 // pred_fallthru
          _
      $region12: #{planar_flow_forward.1} parent=5 // pred_fallthru
        _
      %p158 = scmp.lt.s32.totalorder %s11, 3
      // Predicated region
      $region25: #{planar_flow_forward.1} parent=5 // pred_check
        %p159 = pneg %p158
      $region26: #{planar_flow_forward.1} parent=5 // pred_check_branch
        %161 = sbr.rel (%p159) target = $region28
      $region27: #{planar_flow_forward.1} parent=5 // pred_region
        // Predicated region
        $region29: #{planar_flow_forward.1} parent=27 // pred_check
          %p162 = pneg %p94
        $region30: #{planar_flow_forward.1} parent=27 // pred_check_branch
          %164 = sbr.rel (%p162) target = $region32
        $region31: #{planar_flow_forward.1} parent=27 // pred_region
          %p165 = scmp.lt.s32.totalorder %s11, 2
          %s166 = scalar_select %p165, %s11, 2
          %s167 = smul.addr %s166, 8
          %s168 = scalar_lea.vmem %s3, %s167
        $region32: #{planar_flow_forward.1} parent=27 // pred_fallthru
          _
      $region28: #{planar_flow_forward.1} parent=5 // pred_fallthru
        _
      %p169 = scmp.le.s32.totalorder 1, %s11
      %p170 = scmp.lt.s32.totalorder %s11, 4
      %p171 = pnand %p169, %p170
      %p172 = pneg %p171
      // Predicated region
      $region33: #{planar_flow_forward.1} parent=5 // pred_check
        _
      $region34: #{planar_flow_forward.1} parent=5 // pred_check_branch
        %174 = sbr.rel (%p171) target = $region36
      $region35: #{planar_flow_forward.1} parent=5 // pred_region
        %s175 = ssub.s32 %s11, 1
        // Predicated region
        $region37: #{planar_flow_forward.1} parent=35 // pred_check
          %p176 = pneg %p74
        $region38: #{planar_flow_forward.1} parent=35 // pred_check_branch
          %178 = sbr.rel (%p176) target = $region40
        $region39: #{planar_flow_forward.1} parent=35 // pred_region
          %179 = dma.done [#allocation3], 16
        $region40: #{planar_flow_forward.1} parent=35 // pred_fallthru
          _
        %180 = sfence
        %p181 = pneg %p32
        %p182 = pneg %p29
        %p183 = pneg %p53
        %p184 = pneg %p50
        %p185 = pneg %p74
        %p186 = pneg %p71
        %p187 = scmp.lt.s32.totalorder %s16, 2
        %s188 = scalar_select %p187, %s16, 2
        %s189 = smul.addr %s188, 8
        %s190 = scalar_lea.vmem %s3, %s189
        %p191 = pneg %p100
        %p192 = pneg %p97
        %p193 = pneg %p126
        %p194 = pneg %p123
        %p195 = scmp.lt.s32.totalorder %s16, 2
        %s196 = scalar_select %p195, %s16, 2
        %s197 = smul.addr %s196, 8
        %s198 = scalar_lea.vmem %s4, %s197
        %p199 = scmp.lt.s32.totalorder %s16, 2
        %s200 = scalar_select %p199, %s16, 2
        %s201 = smul.addr %s200, 8
        %s202 = scalar_lea.vmem %s3, %s201
        %p203 = scmp.lt.s32.totalorder %s16, 2
        %s204 = scalar_select %p203, %s16, 2
        %s205 = smul.addr %s204, 8
        %s206 = scalar_lea.vmem %s4, %s205
        %v207 = vld [vmem:[%s202] sm:$0xff]
        %v208 = vld [vmem:[%s0] sm:$0xff]
        %v209 = vld [vmem:[%s0 + $0x8] sm:$0xff]
        %v210 = vld [vmem:[%s0 + $0x10] sm:$0xff]
        %v211 = vld [vmem:[%s0 + $0x18] sm:$0xff]
        %v212 = vld [vmem:[%s0 + $0x20] sm:$0xff]
        %v213 = vld [vmem:[%s0 + $0x28] sm:$0xff]
        %v214 = vld [vmem:[%s0 + $0x30] sm:$0xff]
        %v215 = vld [vmem:[%s0 + $0x38] sm:$0xff]
        %v216 = vld [vmem:[%s0 + $0x40] sm:$0xff]
        %v217 = vld [vmem:[%s0 + $0x48] sm:$0xff]
        %v218 = vld [vmem:[%s0 + $0x50] sm:$0xff]
        %v219 = vld [vmem:[%s0 + $0x58] sm:$0xff]
        %v220 = vld [vmem:[%s0 + $0x60] sm:$0xff]
        %v221 = vld [vmem:[%s0 + $0x68] sm:$0xff]
        %v222 = vld [vmem:[%s0 + $0x70] sm:$0xff]
        %v223 = vld [vmem:[%s0 + $0x78] sm:$0xff]
        %v224 = vld [vmem:[%s1] sm:$0x1]
        %s225 = sld [smem:[#allocation2]]
        %v226 = vstv %s225
        %227 = vmatprep.subr.mxu0 0.0
        %228 = vmatpush1.msra.mxu0 %v208
        %229 = vmatprep.subr.mxu0 0.0
        %230 = vmatpush1.msra.mxu0 %v209
        %231 = vmatprep.subr.mxu0 0.0
        %232 = vmatpush1.msra.mxu0 %v210
        %233 = vmatprep.subr.mxu0 0.0
        %234 = vmatpush1.msra.mxu0 %v211
        %235 = vmatprep.subr.mxu0 0.0
        %236 = vmatpush1.msra.mxu0 %v212
        %237 = vmatprep.subr.mxu0 0.0
        %238 = vmatpush1.msra.mxu0 %v213
        %239 = vmatprep.subr.mxu0 0.0
        %240 = vmatpush1.msra.mxu0 %v214
        %241 = vmatprep.subr.mxu0 0.0
        %242 = vmatpush1.msra.mxu0 %v215
        %243 = vmatprep.subr.mxu0 0.0
        %244 = vmatpush1.msra.mxu0 %v216
        %245 = vmatprep.subr.mxu0 0.0
        %246 = vmatpush1.msra.mxu0 %v217
        %247 = vmatprep.subr.mxu0 0.0
        %248 = vmatpush1.msra.mxu0 %v218
        %249 = vmatprep.subr.mxu0 0.0
        %250 = vmatpush1.msra.mxu0 %v219
        %251 = vmatprep.subr.mxu0 0.0
        %252 = vmatpush1.msra.mxu0 %v220
        %253 = vmatprep.subr.mxu0 0.0
        %254 = vmatpush1.msra.mxu0 %v221
        %255 = vmatprep.subr.mxu0 0.0
        %256 = vmatpush1.msra.mxu0 %v222
        %257 = vmatprep.subr.mxu0 0.0
        %258 = vmatpush1.msra.mxu0 %v223
        %259 = vmatprep.subr.mxu0 0.0
        %260 = vmatpush1.msra.mxu0 0.0
        %261 = vmatprep.subr.mxu0 0.0
        %262 = vmatpush1.msra.mxu0 0.0
        %263 = vmatprep.subr.mxu0 0.0
        %264 = vmatpush1.msra.mxu0 0.0
        %265 = vmatprep.subr.mxu0 0.0
        %266 = vmatpush1.msra.mxu0 0.0
        %267 = vmatprep.subr.mxu0 0.0
        %268 = vmatpush1.msra.mxu0 0.0
        %269 = vmatprep.subr.mxu0 0.0
        %270 = vmatpush1.msra.mxu0 0.0
        %271 = vmatprep.subr.mxu0 0.0
        %272 = vmatpush1.msra.mxu0 0.0
        %273 = vmatprep.subr.mxu0 0.0
        %274 = vmatpush1.msra.mxu0 0.0
        %275 = vmatprep.subr.mxu0 0.0
        %276 = vmatpush1.msra.mxu0 0.0
        %277 = vmatprep.subr.mxu0 0.0
        %278 = vmatpush1.msra.mxu0 0.0
        %279 = vmatprep.subr.mxu0 0.0
        %280 = vmatpush1.msra.mxu0 0.0
        %281 = vmatprep.subr.mxu0 0.0
        %282 = vmatpush1.msra.mxu0 0.0
        %283 = vmatprep.subr.mxu0 0.0
        %284 = vmatpush1.msra.mxu0 0.0
        %285 = vmatprep.subr.mxu0 0.0
        %286 = vmatpush1.msra.mxu0 0.0
        %287 = vmatprep.subr.mxu0 0.0
        %288 = vmatpush1.msra.mxu0 0.0
        %289 = vmatprep.subr.mxu0 0.0
        %290 = vmatpush1.msra.mxu0 0.0
        %291 = vmatprep.mubr.f32.mxu0 0.0
        %292 = vmatmul.mubr.f32.gmra.mrb[0].mxu0 %v207
        %v293 = vpop.f32.mrb[0].mxu0
        %v294 = vadd.f32 %v226, %v293
        %v295 = vpop.f32.mrb[0].mxu0
        %296 = vdwg.mxu0
        %v297 = vtanh.pop %v294
        %v299 = vlaneseq
        %v300 = vshrl.u32 %v299, 7
        %v301 = vsub.s32 0, %v300
        %v302 = vrot.slane %v224, %v301
        %v304 = vmul.f32 %v302, %v297
        %v305 = vadd.f32 %v207, %v304
        %s306 = scalar_lea.vmem %s0, 128
        %v307 = vld [vmem:[%s306] sm:$0xff]
        %v308 = vld [vmem:[%s306 + $0x8] sm:$0xff]
        %v309 = vld [vmem:[%s306 + $0x10] sm:$0xff]
        %v310 = vld [vmem:[%s306 + $0x18] sm:$0xff]
        %v311 = vld [vmem:[%s306 + $0x20] sm:$0xff]
        %v312 = vld [vmem:[%s306 + $0x28] sm:$0xff]
        %v313 = vld [vmem:[%s306 + $0x30] sm:$0xff]
        %v314 = vld [vmem:[%s306 + $0x38] sm:$0xff]
        %v315 = vld [vmem:[%s306 + $0x40] sm:$0xff]
        %v316 = vld [vmem:[%s306 + $0x48] sm:$0xff]
        %v317 = vld [vmem:[%s306 + $0x50] sm:$0xff]
        %v318 = vld [vmem:[%s306 + $0x58] sm:$0xff]
        %v319 = vld [vmem:[%s306 + $0x60] sm:$0xff]
        %v320 = vld [vmem:[%s306 + $0x68] sm:$0xff]
        %v321 = vld [vmem:[%s306 + $0x70] sm:$0xff]
        %v322 = vld [vmem:[%s306 + $0x78] sm:$0xff]
        %s323 = scalar_lea.vmem %s1, 1
        %v324 = vld [vmem:[%s323] sm:$0x1]
        %s325 = sld [smem:[#allocation2 + $0x1]]
        %v326 = vstv %s325
        %327 = vmatprep.subr.mxu0 0.0
        %328 = vmatpush1.msra.mxu0 %v307
        %329 = vmatprep.subr.mxu0 0.0
        %330 = vmatpush1.msra.mxu0 %v308
        %331 = vmatprep.subr.mxu0 0.0
        %332 = vmatpush1.msra.mxu0 %v309
        %333 = vmatprep.subr.mxu0 0.0
        %334 = vmatpush1.msra.mxu0 %v310
        %335 = vmatprep.subr.mxu0 0.0
        %336 = vmatpush1.msra.mxu0 %v311
        %337 = vmatprep.subr.mxu0 0.0
        %338 = vmatpush1.msra.mxu0 %v312
        %339 = vmatprep.subr.mxu0 0.0
        %340 = vmatpush1.msra.mxu0 %v313
        %341 = vmatprep.subr.mxu0 0.0
        %342 = vmatpush1.msra.mxu0 %v314
        %343 = vmatprep.subr.mxu0 0.0
        %344 = vmatpush1.msra.mxu0 %v315
        %345 = vmatprep.subr.mxu0 0.0
        %346 = vmatpush1.msra.mxu0 %v316
        %347 = vmatprep.subr.mxu0 0.0
        %348 = vmatpush1.msra.mxu0 %v317
        %349 = vmatprep.subr.mxu0 0.0
        %350 = vmatpush1.msra.mxu0 %v318
        %351 = vmatprep.subr.mxu0 0.0
        %352 = vmatpush1.msra.mxu0 %v319
        %353 = vmatprep.subr.mxu0 0.0
        %354 = vmatpush1.msra.mxu0 %v320
        %355 = vmatprep.subr.mxu0 0.0
        %356 = vmatpush1.msra.mxu0 %v321
        %357 = vmatprep.subr.mxu0 0.0
        %358 = vmatpush1.msra.mxu0 %v322
        %359 = vmatprep.subr.mxu0 0.0
        %360 = vmatpush1.msra.mxu0 0.0
        %361 = vmatprep.subr.mxu0 0.0
        %362 = vmatpush1.msra.mxu0 0.0
        %363 = vmatprep.subr.mxu0 0.0
        %364 = vmatpush1.msra.mxu0 0.0
        %365 = vmatprep.subr.mxu0 0.0
        %366 = vmatpush1.msra.mxu0 0.0
        %367 = vmatprep.subr.mxu0 0.0
        %368 = vmatpush1.msra.mxu0 0.0
        %369 = vmatprep.subr.mxu0 0.0
        %370 = vmatpush1.msra.mxu0 0.0
        %371 = vmatprep.subr.mxu0 0.0
        %372 = vmatpush1.msra.mxu0 0.0
        %373 = vmatprep.subr.mxu0 0.0
        %374 = vmatpush1.msra.mxu0 0.0
        %375 = vmatprep.subr.mxu0 0.0
        %376 = vmatpush1.msra.mxu0 0.0
        %377 = vmatprep.subr.mxu0 0.0
        %378 = vmatpush1.msra.mxu0 0.0
        %379 = vmatprep.subr.mxu0 0.0
        %380 = vmatpush1.msra.mxu0 0.0
        %381 = vmatprep.subr.mxu0 0.0
        %382 = vmatpush1.msra.mxu0 0.0
        %383 = vmatprep.subr.mxu0 0.0
        %384 = vmatpush1.msra.mxu0 0.0
        %385 = vmatprep.subr.mxu0 0.0
        %386 = vmatpush1.msra.mxu0 0.0
        %387 = vmatprep.subr.mxu0 0.0
        %388 = vmatpush1.msra.mxu0 0.0
        %389 = vmatprep.subr.mxu0 0.0
        %390 = vmatpush1.msra.mxu0 0.0
        %391 = vmatprep.mubr.f32.mxu0 0.0
        %392 = vmatmul.mubr.f32.gmra.mrb[0].mxu0 %v305
        %v393 = vpop.f32.mrb[0].mxu0
        %v394 = vadd.f32 %v326, %v393
        %v395 = vpop.f32.mrb[0].mxu0
        %396 = vdwg.mxu0
        %v397 = vtanh.pop %v394
        %v399 = vlaneseq
        %v400 = vshrl.u32 %v399, 7
        %v401 = vsub.s32 0, %v400
        %v402 = vrot.slane %v324, %v401
        %v404 = vmul.f32 %v402, %v397
        %v405 = vadd.f32 %v305, %v404
        %s406 = scalar_lea.vmem %s0, 256
        %v407 = vld [vmem:[%s406] sm:$0xff]
        %v408 = vld [vmem:[%s406 + $0x8] sm:$0xff]
        %v409 = vld [vmem:[%s406 + $0x10] sm:$0xff]
        %v410 = vld [vmem:[%s406 + $0x18] sm:$0xff]
        %v411 = vld [vmem:[%s406 + $0x20] sm:$0xff]
        %v412 = vld [vmem:[%s406 + $0x28] sm:$0xff]
        %v413 = vld [vmem:[%s406 + $0x30] sm:$0xff]
        %v414 = vld [vmem:[%s406 + $0x38] sm:$0xff]
        %v415 = vld [vmem:[%s406 + $0x40] sm:$0xff]
        %v416 = vld [vmem:[%s406 + $0x48] sm:$0xff]
        %v417 = vld [vmem:[%s406 + $0x50] sm:$0xff]
        %v418 = vld [vmem:[%s406 + $0x58] sm:$0xff]
        %v419 = vld [vmem:[%s406 + $0x60] sm:$0xff]
        %v420 = vld [vmem:[%s406 + $0x68] sm:$0xff]
        %v421 = vld [vmem:[%s406 + $0x70] sm:$0xff]
        %v422 = vld [vmem:[%s406 + $0x78] sm:$0xff]
        %s423 = scalar_lea.vmem %s1, 2
        %v424 = vld [vmem:[%s423] sm:$0x1]
        %s425 = sld [smem:[#allocation2 + $0x2]]
        %v426 = vstv %s425
        %427 = vmatprep.subr.mxu0 0.0
        %428 = vmatpush1.msra.mxu0 %v407
        %429 = vmatprep.subr.mxu0 0.0
        %430 = vmatpush1.msra.mxu0 %v408
        %431 = vmatprep.subr.mxu0 0.0
        %432 = vmatpush1.msra.mxu0 %v409
        %433 = vmatprep.subr.mxu0 0.0
        %434 = vmatpush1.msra.mxu0 %v410
        %435 = vmatprep.subr.mxu0 0.0
        %436 = vmatpush1.msra.mxu0 %v411
        %437 = vmatprep.subr.mxu0 0.0
        %438 = vmatpush1.msra.mxu0 %v412
        %439 = vmatprep.subr.mxu0 0.0
        %440 = vmatpush1.msra.mxu0 %v413
        %441 = vmatprep.subr.mxu0 0.0
        %442 = vmatpush1.msra.mxu0 %v414
        %443 = vmatprep.subr.mxu0 0.0
        %444 = vmatpush1.msra.mxu0 %v415
        %445 = vmatprep.subr.mxu0 0.0
        %446 = vmatpush1.msra.mxu0 %v416
        %447 = vmatprep.subr.mxu0 0.0
        %448 = vmatpush1.msra.mxu0 %v417
        %449 = vmatprep.subr.mxu0 0.0
        %450 = vmatpush1.msra.mxu0 %v418
        %451 = vmatprep.subr.mxu0 0.0
        %452 = vmatpush1.msra.mxu0 %v419
        %453 = vmatprep.subr.mxu0 0.0
        %454 = vmatpush1.msra.mxu0 %v420
        %455 = vmatprep.subr.mxu0 0.0
        %456 = vmatpush1.msra.mxu0 %v421
        %457 = vmatprep.subr.mxu0 0.0
        %458 = vmatpush1.msra.mxu0 %v422
        %459 = vmatprep.subr.mxu0 0.0
        %460 = vmatpush1.msra.mxu0 0.0
        %461 = vmatprep.subr.mxu0 0.0
        %462 = vmatpush1.msra.mxu0 0.0
        %463 = vmatprep.subr.mxu0 0.0
        %464 = vmatpush1.msra.mxu0 0.0
        %465 = vmatprep.subr.mxu0 0.0
        %466 = vmatpush1.msra.mxu0 0.0
        %467 = vmatprep.subr.mxu0 0.0
        %468 = vmatpush1.msra.mxu0 0.0
        %469 = vmatprep.subr.mxu0 0.0
        %470 = vmatpush1.msra.mxu0 0.0
        %471 = vmatprep.subr.mxu0 0.0
        %472 = vmatpush1.msra.mxu0 0.0
        %473 = vmatprep.subr.mxu0 0.0
        %474 = vmatpush1.msra.mxu0 0.0
        %475 = vmatprep.subr.mxu0 0.0
        %476 = vmatpush1.msra.mxu0 0.0
        %477 = vmatprep.subr.mxu0 0.0
        %478 = vmatpush1.msra.mxu0 0.0
        %479 = vmatprep.subr.mxu0 0.0
        %480 = vmatpush1.msra.mxu0 0.0
        %481 = vmatprep.subr.mxu0 0.0
        %482 = vmatpush1.msra.mxu0 0.0
        %483 = vmatprep.subr.mxu0 0.0
        %484 = vmatpush1.msra.mxu0 0.0
        %485 = vmatprep.subr.mxu0 0.0
        %486 = vmatpush1.msra.mxu0 0.0
        %487 = vmatprep.subr.mxu0 0.0
        %488 = vmatpush1.msra.mxu0 0.0
        %489 = vmatprep.subr.mxu0 0.0
        %490 = vmatpush1.msra.mxu0 0.0
        %491 = vmatprep.mubr.f32.mxu0 0.0
        %492 = vmatmul.mubr.f32.gmra.mrb[0].mxu0 %v405
        %v493 = vpop.f32.mrb[0].mxu0
        %v494 = vadd.f32 %v426, %v493
        %v495 = vpop.f32.mrb[0].mxu0
        %496 = vdwg.mxu0
        %v497 = vtanh.pop %v494
        %v499 = vlaneseq
        %v500 = vshrl.u32 %v499, 7
        %v501 = vsub.s32 0, %v500
        %v502 = vrot.slane %v424, %v501
        %v504 = vmul.f32 %v502, %v497
        %v505 = vadd.f32 %v405, %v504
        %s506 = scalar_lea.vmem %s0, 384
        %v507 = vld [vmem:[%s506] sm:$0xff]
        %v508 = vld [vmem:[%s506 + $0x8] sm:$0xff]
        %v509 = vld [vmem:[%s506 + $0x10] sm:$0xff]
        %v510 = vld [vmem:[%s506 + $0x18] sm:$0xff]
        %v511 = vld [vmem:[%s506 + $0x20] sm:$0xff]
        %v512 = vld [vmem:[%s506 + $0x28] sm:$0xff]
        %v513 = vld [vmem:[%s506 + $0x30] sm:$0xff]
        %v514 = vld [vmem:[%s506 + $0x38] sm:$0xff]
        %v515 = vld [vmem:[%s506 + $0x40] sm:$0xff]
        %v516 = vld [vmem:[%s506 + $0x48] sm:$0xff]
        %v517 = vld [vmem:[%s506 + $0x50] sm:$0xff]
        %v518 = vld [vmem:[%s506 + $0x58] sm:$0xff]
        %v519 = vld [vmem:[%s506 + $0x60] sm:$0xff]
        %v520 = vld [vmem:[%s506 + $0x68] sm:$0xff]
        %v521 = vld [vmem:[%s506 + $0x70] sm:$0xff]
        %v522 = vld [vmem:[%s506 + $0x78] sm:$0xff]
        %s523 = scalar_lea.vmem %s1, 3
        %v524 = vld [vmem:[%s523] sm:$0x1]
        %s525 = sld [smem:[#allocation2 + $0x3]]
        %v526 = vstv %s525
        %527 = vmatprep.subr.mxu0 0.0
        %528 = vmatpush1.msra.mxu0 %v507
        %529 = vmatprep.subr.mxu0 0.0
        %530 = vmatpush1.msra.mxu0 %v508
        %531 = vmatprep.subr.mxu0 0.0
        %532 = vmatpush1.msra.mxu0 %v509
        %533 = vmatprep.subr.mxu0 0.0
        %534 = vmatpush1.msra.mxu0 %v510
        %535 = vmatprep.subr.mxu0 0.0
        %536 = vmatpush1.msra.mxu0 %v511
        %537 = vmatprep.subr.mxu0 0.0
        %538 = vmatpush1.msra.mxu0 %v512
        %539 = vmatprep.subr.mxu0 0.0
        %540 = vmatpush1.msra.mxu0 %v513
        %541 = vmatprep.subr.mxu0 0.0
        %542 = vmatpush1.msra.mxu0 %v514
        %543 = vmatprep.subr.mxu0 0.0
        %544 = vmatpush1.msra.mxu0 %v515
        %545 = vmatprep.subr.mxu0 0.0
        %546 = vmatpush1.msra.mxu0 %v516
        %547 = vmatprep.subr.mxu0 0.0
        %548 = vmatpush1.msra.mxu0 %v517
        %549 = vmatprep.subr.mxu0 0.0
        %550 = vmatpush1.msra.mxu0 %v518
        %551 = vmatprep.subr.mxu0 0.0
        %552 = vmatpush1.msra.mxu0 %v519
        %553 = vmatprep.subr.mxu0 0.0
        %554 = vmatpush1.msra.mxu0 %v520
        %555 = vmatprep.subr.mxu0 0.0
        %556 = vmatpush1.msra.mxu0 %v521
        %557 = vmatprep.subr.mxu0 0.0
        %558 = vmatpush1.msra.mxu0 %v522
        %559 = vmatprep.subr.mxu0 0.0
        %560 = vmatpush1.msra.mxu0 0.0
        %561 = vmatprep.subr.mxu0 0.0
        %562 = vmatpush1.msra.mxu0 0.0
        %563 = vmatprep.subr.mxu0 0.0
        %564 = vmatpush1.msra.mxu0 0.0
        %565 = vmatprep.subr.mxu0 0.0
        %566 = vmatpush1.msra.mxu0 0.0
        %567 = vmatprep.subr.mxu0 0.0
        %568 = vmatpush1.msra.mxu0 0.0
        %569 = vmatprep.subr.mxu0 0.0
        %570 = vmatpush1.msra.mxu0 0.0
        %571 = vmatprep.subr.mxu0 0.0
        %572 = vmatpush1.msra.mxu0 0.0
        %573 = vmatprep.subr.mxu0 0.0
        %574 = vmatpush1.msra.mxu0 0.0
        %575 = vmatprep.subr.mxu0 0.0
        %576 = vmatpush1.msra.mxu0 0.0
        %577 = vmatprep.subr.mxu0 0.0
        %578 = vmatpush1.msra.mxu0 0.0
        %579 = vmatprep.subr.mxu0 0.0
        %580 = vmatpush1.msra.mxu0 0.0
        %581 = vmatprep.subr.mxu0 0.0
        %582 = vmatpush1.msra.mxu0 0.0
        %583 = vmatprep.subr.mxu0 0.0
        %584 = vmatpush1.msra.mxu0 0.0
        %585 = vmatprep.subr.mxu0 0.0
        %586 = vmatpush1.msra.mxu0 0.0
        %587 = vmatprep.subr.mxu0 0.0
        %588 = vmatpush1.msra.mxu0 0.0
        %589 = vmatprep.subr.mxu0 0.0
        %590 = vmatpush1.msra.mxu0 0.0
        %591 = vmatprep.mubr.f32.mxu0 0.0
        %592 = vmatmul.mubr.f32.gmra.mrb[0].mxu0 %v505
        %v593 = vpop.f32.mrb[0].mxu0
        %v594 = vadd.f32 %v526, %v593
        %v595 = vpop.f32.mrb[0].mxu0
        %596 = vdwg.mxu0
        %v597 = vtanh.pop %v594
        %v599 = vlaneseq
        %v600 = vshrl.u32 %v599, 7
        %v601 = vsub.s32 0, %v600
        %v602 = vrot.slane %v524, %v601
        %v604 = vmul.f32 %v602, %v597
        %v605 = vadd.f32 %v505, %v604
        %606 = vst [vmem:[%s206] sm:$0xff] %v605
        %p607 = scmp.lt.s32.totalorder %s16, 2
        %s608 = scalar_select %p607, %s16, 2
        %s609 = smul.addr %s608, 8
        %s610 = scalar_lea.vmem %s4, %s609
        // Predicated region
        $region41: #{planar_flow_forward.1} parent=35 // pred_check
          %p611 = pneg %p123
        $region42: #{planar_flow_forward.1} parent=35 // pred_check_branch
          %613 = sbr.rel (%p611) target = $region44
        $region43: #{planar_flow_forward.1} parent=35 // pred_region
          _
        $region44: #{planar_flow_forward.1} parent=35 // pred_fallthru
          _
      $region36: #{planar_flow_forward.1} parent=5 // pred_fallthru
        _
      %p614 = scmp.le.s32.totalorder 2, %s11
      // Predicated region
      $region45: #{planar_flow_forward.1} parent=5 // pred_check
        %p615 = pneg %p614
      $region46: #{planar_flow_forward.1} parent=5 // pred_check_branch
        %617 = sbr.rel (%p615) target = $region48
      $region47: #{planar_flow_forward.1} parent=5 // pred_region
        %s618 = ssub.s32 %s11, 2
        // Predicated region
        $region49: #{planar_flow_forward.1} parent=47 // pred_check
          %p619 = pneg %p129
        $region50: #{planar_flow_forward.1} parent=47 // pred_check_branch
          %621 = sbr.rel (%p619) target = $region52
        $region51: #{planar_flow_forward.1} parent=47 // pred_region
          %p622 = scmp.lt.s32.totalorder %s17, 2
          %s623 = scalar_select %p622, %s17, 2
          %s624 = smul.addr %s623, 8
          %s625 = scalar_lea.vmem %s4, %s624
        $region52: #{planar_flow_forward.1} parent=47 // pred_fallthru
          _
      $region48: #{planar_flow_forward.1} parent=5 // pred_fallthru
        _
    $region6: #{planar_flow_forward.1} parent=1 // loop_footer
      %s15 = sadd.s32 1, %s11
    $region7: #{planar_flow_forward.1} parent=1 // loop_footer_branch
      %10 = sbr.rel target = $region3
    $region8: #{planar_flow_forward.1} parent=1 // loop_exit
      _
    %626 = vsyncpa [#allocation3], 1
    %s627 = scalar_lea.sflag [#allocation3], 1
    %628 = vsyncpa %s627, 1

</llo_original>
